<compile_context>
chip_gen: v6e
topology: v6e:2x2x1
jax: 0.10.0
libtpu: 0.0.40
codegen_flags: <defaults>
</compile_context>

<pallas_src>
import jax
import jax.numpy as jnp
from jax.experimental import pallas as pl
from jax.experimental.pallas import tpu as pltpu


def _round_up(x, m):
    return ((x + m - 1) // m) * m


def _linear_kernel_inplace(x_ref, w_ref, b_ref, o_ref):
    """f32 output: accumulate directly into the K-resident output tile."""
    k = pl.program_id(2)
    partial = jnp.dot(x_ref[...], w_ref[...], preferred_element_type=jnp.float32)

    @pl.when(k == 0)
    def _():
        # Fold zero-init and the broadcasted bias add into the first K step.
        o_ref[...] = b_ref[...] + partial

    @pl.when(k != 0)
    def _():
        o_ref[...] += partial


def _linear_kernel_scratch(x_ref, w_ref, b_ref, o_ref, acc_ref):
    """Narrow output dtype: f32 scratch accumulator, single cast at the end."""
    k = pl.program_id(2)
    partial = jnp.dot(x_ref[...], w_ref[...], preferred_element_type=jnp.float32)

    @pl.when(k == 0)
    def _():
        acc_ref[...] = partial

    @pl.when(k != 0)
    def _():
        acc_ref[...] += partial

    @pl.when(k == pl.num_programs(2) - 1)
    def _():
        o_ref[...] = (acc_ref[...] + b_ref[...]).astype(o_ref.dtype)


def sparse_input_linear(x, weight, bias, *, tm=512, tn=1024, tk=1024,
                        out_dtype=None):
    """y = x @ weight + bias as a tiled Pallas TPU kernel (MXU, f32 accum)."""
    M, K = x.shape
    K2, N = weight.shape
    assert K == K2
    assert bias.shape == (N,)

    if out_dtype is None:
        out_dtype = jnp.promote_types(
            jnp.promote_types(x.dtype, weight.dtype), bias.dtype)
    out_dtype = jnp.dtype(out_dtype)

    # Sublane alignment for the M axis depends on operand packing.
    sub_m = {4: 8, 2: 16, 1: 32}.get(jnp.dtype(x.dtype).itemsize, 8)

    MXU = 256  # v6e/v7x systolic edge; also a multiple of v5e's 128.
    tm = min(tm, _round_up(M, sub_m))
    tn = min(tn, _round_up(N, 128))
    tk = min(tk, _round_up(K, 128))
    # Prefer 256-aligned tn/tk when the problem can fill the 256x256 MXUs.
    if N >= MXU and tn % MXU:
        tn = _round_up(tn, MXU)
    if K >= MXU and tk % MXU:
        tk = _round_up(tk, MXU)

    Mp, Np, Kp = _round_up(M, tm), _round_up(N, tn), _round_up(K, tk)

    # v7x has 2 TensorCores sharded over the parallel grid axes; if the whole
    # output is one tile but wide enough to split, halve tn so both get work.
    if Mp // tm == 1 and Np // tn == 1 and Np >= 2 * 128:
        tn = max(128, _round_up(Np // 2, 128))
        Np = _round_up(N, tn)

    # Pad only when needed (zero padding is exact for matmul + bias).
    x_p = x if (Mp == M and Kp == K) else jnp.pad(x, ((0, Mp - M), (0, Kp - K)))
    w_p = weight if (Kp == K and Np == N) else jnp.pad(
        weight, ((0, Kp - K), (0, Np - N)))
    b_row = bias.reshape(1, N)
    b_p = b_row if Np == N else jnp.pad(b_row, ((0, 0), (0, Np - N)))

    grid = (Mp // tm, Np // tn, Kp // tk)

    direct = out_dtype == jnp.float32
    kernel = _linear_kernel_inplace if direct else _linear_kernel_scratch
    scratch = [] if direct else [pltpu.VMEM((tm, tn), jnp.float32)]

    xi = jnp.dtype(x.dtype).itemsize
    wi = jnp.dtype(weight.dtype).itemsize
    oi = out_dtype.itemsize
    working = (2 * (tm * tk * xi + tk * tn * wi + tm * tn * oi)
               + (0 if direct else tm * tn * 4) + 2 * tn * 4)
    vmem_limit = max(32 << 20, min(100 << 20, int(working * 1.5)))

    cost = pl.CostEstimate(
        flops=2 * Mp * Np * Kp,
        transcendentals=0,
        bytes_accessed=Mp * Kp * xi + Kp * Np * wi + Mp * Np * oi,
    )

    out = pl.pallas_call(
        kernel,
        out_shape=jax.ShapeDtypeStruct((Mp, Np), out_dtype),
        grid_spec=pltpu.PrefetchScalarGridSpec(
            num_scalar_prefetch=0,
            grid=grid,
            in_specs=[
                pl.BlockSpec((tm, tk), lambda i, j, k: (i, k)),  # x tile
                pl.BlockSpec((tk, tn), lambda i, j, k: (k, j)),  # weight tile
                pl.BlockSpec((1, tn), lambda i, j, k: (0, j)),   # bias row tile
            ],
            out_specs=pl.BlockSpec((tm, tn), lambda i, j, k: (i, j)),
            scratch_shapes=scratch,
        ),
        compiler_params=pltpu.CompilerParams(
            dimension_semantics=("parallel", "parallel", "arbitrary"),
            vmem_limit_bytes=vmem_limit,
        ),
        cost_estimate=cost,
    )(x_p, w_p, b_p)

    if (Mp, Np) != (M, N):
        out = out[:M, :N]
    return out


if __name__ == "__main__":
    # Deterministic setup mirroring SparseInputLinear.__init__ /
    # reset_parameters: uniform(-stdv, stdv) with stdv = 1/sqrt(out_dim).
    inp_dim, out_dim = 32, 64
    n_rows = 16

    key = jax.random.PRNGKey(0)
    k_x, k_w, k_b = jax.random.split(key, 3)

    stdv = 1.0 / jnp.sqrt(jnp.float32(out_dim))
    weight = jax.random.uniform(
        k_w, (inp_dim, out_dim), dtype=jnp.float32, minval=-stdv, maxval=stdv)
    bias = jax.random.uniform(
        k_b, (out_dim,), dtype=jnp.float32, minval=-stdv, maxval=stdv)
    x = jax.random.normal(k_x, (n_rows, inp_dim), dtype=jnp.float32)

    y = sparse_input_linear(x, weight, bias)
    y = jax.block_until_ready(y)

    y_ref = x @ weight + bias
    assert y.shape == (n_rows, out_dim)
    assert jnp.allclose(y, y_ref, atol=1e-5, rtol=1e-5)

    # Multi-tile grid along every axis (padding + K-accumulation + M/N tiling),
    # with small tile overrides. f32 path -> in-place accumulation kernel.
    k2 = jax.random.PRNGKey(1)
    k_x2, k_w2, k_b2 = jax.random.split(k2, 3)
    M2, K2, N2 = 24, 300, 200
    x2 = jax.random.normal(k_x2, (M2, K2), dtype=jnp.float32)
    w2 = jax.random.normal(k_w2, (K2, N2), dtype=jnp.float32) * 0.05
    b2 = jax.random.normal(k_b2, (N2,), dtype=jnp.float32) * 0.05
    y2 = sparse_input_linear(x2, w2, b2, tm=16, tn=128, tk=128)
    y2 = jax.block_until_ready(y2)
    y2_ref = x2 @ w2 + b2
    assert y2.shape == (M2, N2)
    assert jnp.allclose(y2, y2_ref, atol=1e-4, rtol=1e-4)

    # bf16 operand path (no f32 casts; f32 accumulation; scratch-kernel epilogue
    # since the output dtype is bf16). Also exercises the v7x N-split heuristic.
    k3 = jax.random.PRNGKey(2)
    k_x3, k_w3, k_b3 = jax.random.split(k3, 3)
    M3, K3, N3 = 32, 256, 256
    x3 = jax.random.normal(k_x3, (M3, K3), dtype=jnp.float32).astype(jnp.bfloat16)
    w3 = (jax.random.normal(k_w3, (K3, N3), dtype=jnp.float32) * 0.05).astype(
        jnp.bfloat16)
    b3 = (jax.random.normal(k_b3, (N3,), dtype=jnp.float32) * 0.05).astype(
        jnp.bfloat16)
    y3 = sparse_input_linear(x3, w3, b3)
    y3 = jax.block_until_ready(y3)
    y3_ref = (x3.astype(jnp.float32) @ w3.astype(jnp.float32)
              + b3.astype(jnp.float32))
    assert y3.shape == (M3, N3)
    assert jnp.allclose(y3.astype(jnp.float32), y3_ref, atol=5e-2, rtol=5e-2)

    print("KERNEL_OK")
</pallas_src>

<mosaic_0001>
module attributes {stable_mosaic.version = 11 : i64} {
  func.func @_linear_kernel_inplace(%arg0: i32, %arg1: i32, %arg2: i32, %arg3: memref<16x128xf32, #tpu.memory_space<vmem>>, %arg4: memref<128x128xf32, #tpu.memory_space<vmem>>, %arg5: memref<1x128xf32, #tpu.memory_space<vmem>>, %arg6: memref<16x128xf32, #tpu.memory_space<vmem>>) attributes {dimension_semantics = [#tpu.dimension_semantics<parallel>, #tpu.dimension_semantics<parallel>, #tpu.dimension_semantics<arbitrary>], iteration_bounds = array<i64: 1, 1, 1>, scalar_prefetch = 0 : i64, scratch_operands = 0 : i64, tpu.core_type = #tpu.core_type<tc>, window_params = [{transform_indices = @transform_0, window_bounds = array<i64: 16, 128>}, {transform_indices = @transform_1, window_bounds = array<i64: 128, 128>}, {transform_indices = @transform_2, window_bounds = array<i64: 1, 128>}, {transform_indices = @transform_3, window_bounds = array<i64: 16, 128>}]} {
    %c0 = arith.constant 0 : index
    %c0_0 = arith.constant 0 : index
    %0 = vector.load %arg3[%c0, %c0_0] : memref<16x128xf32, #tpu.memory_space<vmem>>, vector<16x128xf32>
    %c0_1 = arith.constant 0 : index
    %c0_2 = arith.constant 0 : index
    %1 = vector.load %arg4[%c0_1, %c0_2] : memref<128x128xf32, #tpu.memory_space<vmem>>, vector<128x128xf32>
    %cst = arith.constant dense<0.000000e+00> : vector<16x128xf32>
    %2 = tpu.matmul %0, %1, %cst {dimension_numbers = #tpu.dot_dimension_numbers<[1], [0], [0], [1], [0, 0, 1, 1], [], []>} : vector<16x128xf32>, vector<128x128xf32>, vector<16x128xf32> -> vector<16x128xf32>
    %c0_i32 = arith.constant 0 : i32
    %3 = arith.cmpi eq, %arg2, %c0_i32 : i32
    %4 = arith.extui %3 : i1 to i32
    %c0_i32_3 = arith.constant 0 : i32
    %5 = arith.cmpi ne, %4, %c0_i32_3 : i32
    scf.if %5 {
      %c0_6 = arith.constant 0 : index
      %c0_7 = arith.constant 0 : index
      %9 = vector.load %arg5[%c0_6, %c0_7] : memref<1x128xf32, #tpu.memory_space<vmem>>, vector<1x128xf32>
      %10 = vector.broadcast %9 : vector<1x128xf32> to vector<16x128xf32>
      %11 = arith.addf %10, %2 : vector<16x128xf32>
      %c0_8 = arith.constant 0 : index
      %c0_9 = arith.constant 0 : index
      %12 = vector.load %arg6[%c0_8, %c0_9] : memref<16x128xf32, #tpu.memory_space<vmem>>, vector<16x128xf32>
      tpu.vector_store %arg6[%c0_8, %c0_9], %11 {strides = array<i32>} : memref<16x128xf32, #tpu.memory_space<vmem>>, vector<16x128xf32>,
    } else {
    }
    %c0_i32_4 = arith.constant 0 : i32
    %6 = arith.cmpi ne, %arg2, %c0_i32_4 : i32
    %7 = arith.extui %6 : i1 to i32
    %c0_i32_5 = arith.constant 0 : i32
    %8 = arith.cmpi ne, %7, %c0_i32_5 : i32
    scf.if %8 {
      %c0_6 = arith.constant 0 : index
      %c0_7 = arith.constant 0 : index
      %9 = vector.load %arg6[%c0_6, %c0_7] : memref<16x128xf32, #tpu.memory_space<vmem>>, vector<16x128xf32>
      %10 = arith.addf %9, %2 : vector<16x128xf32>
      %c0_8 = arith.constant 0 : index
      %c0_9 = arith.constant 0 : index
      %11 = vector.load %arg6[%c0_8, %c0_9] : memref<16x128xf32, #tpu.memory_space<vmem>>, vector<16x128xf32>
      tpu.vector_store %arg6[%c0_8, %c0_9], %10 {strides = array<i32>} : memref<16x128xf32, #tpu.memory_space<vmem>>, vector<16x128xf32>,
    } else {
    }
    return
  }
  func.func @transform_0(%arg0: i32, %arg1: i32, %arg2: i32) -> (i32, i32) {
    %c0_i32 = arith.constant 0 : i32
    return %arg0, %arg2 : i32, i32
  }
  func.func @transform_1(%arg0: i32, %arg1: i32, %arg2: i32) -> (i32, i32) {
    %c0_i32 = arith.constant 0 : i32
    return %arg2, %arg1 : i32, i32
  }
  func.func @transform_2(%arg0: i32, %arg1: i32, %arg2: i32) -> (i32, i32) {
    %c0_i32 = arith.constant 0 : i32
    %c0_i32_0 = arith.constant 0 : i32
    return %c0_i32, %arg1 : i32, i32
  }
  func.func @transform_3(%arg0: i32, %arg1: i32, %arg2: i32) -> (i32, i32) {
    %c0_i32 = arith.constant 0 : i32
    return %arg0, %arg1 : i32, i32
  }
}

</mosaic_0001>

<llo_original>
// kernel: tpu_custom_call.1
$region0: #{tpu_custom_call.1}
  #allocation0 [shape = 'u32[]', space=smem, size = 0x4, offset = 0x4, fixed_abs, tag = 'smem constant byte address 0x4 - core index']
  #allocation1 [shape = 'u32[144,128]{1,0:T(1,128)}', space=vmem, size = 0x12000, scoped, tag = 'internal scratch']
  %s0 = inlined_call_operand.hbm [shape: f32[16,128], index: 0, kind: input, shape index: {}]
  %s1 = inlined_call_operand.hbm [shape: f32[128,128], index: 1, kind: input, shape index: {}]
  %s2 = inlined_call_operand.vmem [shape: f32[1,128], index: 2, kind: input, shape index: {}]
  %s3 = inlined_call_operand.hbm [shape: f32[16,128], index: 3, kind: output, shape index: {}]
  %s4 = sld [smem:[#allocation0]]
  $region38: #{tpu_custom_call.1} parent=0
    _
  %s6 = ssub.s32 1, %s4
  %s7 = scalar_select 0, %s6, %s4
  $region1: #{tpu_custom_call.1} parent=0
    #allocation2 [shape = 'u8[8192]{0}', space=vmem, size = 0x2000, scoped, tag = 'input window, operand 0, single buffered']
    #allocation3 [shape = 's32[1]{0}', space=sflag, size = 0x4, scoped, tag = 'scoped memory for tpu_custom_call.1']
    #allocation4 [shape = 's32[1]{0}', space=sflag, size = 0x4, scoped, tag = 'scoped memory for tpu_custom_call.1']
    #allocation5 [shape = 'u8[65536]{0}', space=vmem, size = 0x10000, scoped, tag = 'input window, operand 1, single buffered']
    #allocation6 [shape = 's32[1]{0}', space=sflag, size = 0x4, scoped, tag = 'scoped memory for tpu_custom_call.1']
    #allocation7 [shape = 'u8[8192]{0}', space=vmem, size = 0x2000, scoped, tag = 'output window, operand 0, single buffered']
    %8 = vsyncpa [#allocation3], 0
    %9 = vsyncpa [#allocation6], 0
    %10 = vsyncpa [#allocation4], 0
    // Predicated region
    $region2: #{tpu_custom_call.1} parent=1 // pred_check
      _
    $region3: #{tpu_custom_call.1} parent=1 // pred_check_branch
      %12 = sbr.rel (0) target = $region5
    $region4: #{tpu_custom_call.1} parent=1 // pred_region
      %s14 = ssub.s32 256, 256
      %15 = vsyncadd [#allocation3], %s14
      %s16 = sshll.u32 [#allocation2], 4
      %s17 = int_to_ptr.vmem [resolvable:$true] %s16
      %22 = dma.hbm_to_vmem [thread:$0]  %s0, 256, %s17, [#allocation3], 128, 128, 8
    $region5: #{tpu_custom_call.1} parent=1 // pred_fallthru
      _
    // Predicated region
    $region6: #{tpu_custom_call.1} parent=1 // pred_check
      _
    $region7: #{tpu_custom_call.1} parent=1 // pred_check_branch
      %24 = sbr.rel (0) target = $region9
    $region8: #{tpu_custom_call.1} parent=1 // pred_region
      %s26 = ssub.s32 2048, 2048
      %27 = vsyncadd [#allocation6], %s26
      %s28 = sshll.u32 [#allocation5], 4
      %s29 = int_to_ptr.vmem [resolvable:$true] %s28
      %34 = dma.hbm_to_vmem [thread:$0]  %s1, 2048, %s29, [#allocation6], 128, 128, 8
    $region9: #{tpu_custom_call.1} parent=1 // pred_fallthru
      _
    // Predicated region
    $region10: #{tpu_custom_call.1} parent=1 // pred_check
      _
    $region11: #{tpu_custom_call.1} parent=1 // pred_check_branch
      %36 = sbr.rel (0) target = $region13
    $region12: #{tpu_custom_call.1} parent=1 // pred_region
      _
    $region13: #{tpu_custom_call.1} parent=1 // pred_fallthru
      _
    // Predicated region
    $region14: #{tpu_custom_call.1} parent=1 // pred_check
      _
    $region15: #{tpu_custom_call.1} parent=1 // pred_check_branch
      %38 = sbr.rel (0) target = $region17
    $region16: #{tpu_custom_call.1} parent=1 // pred_region
      %39 = dma.done [#allocation3], 256
    $region17: #{tpu_custom_call.1} parent=1 // pred_fallthru
      _
    // Predicated region
    $region18: #{tpu_custom_call.1} parent=1 // pred_check
      _
    $region19: #{tpu_custom_call.1} parent=1 // pred_check_branch
      %41 = sbr.rel (0) target = $region21
    $region20: #{tpu_custom_call.1} parent=1 // pred_region
      %42 = dma.done [#allocation6], 2048
    $region21: #{tpu_custom_call.1} parent=1 // pred_fallthru
      _
    %v43 = vld [vmem:[#allocation2] sm:$0xff]
    %v44 = vld [vmem:[#allocation2 + $0x8] sm:$0xff]
    %v45 = vld [vmem:[#allocation5] sm:$0xff]
    %v46 = vld [vmem:[#allocation5 + $0x8] sm:$0xff]
    %v47 = vld [vmem:[#allocation5 + $0x10] sm:$0xff]
    %v48 = vld [vmem:[#allocation5 + $0x18] sm:$0xff]
    %v49 = vld [vmem:[#allocation5 + $0x20] sm:$0xff]
    %v50 = vld [vmem:[#allocation5 + $0x28] sm:$0xff]
    %v51 = vld [vmem:[#allocation5 + $0x30] sm:$0xff]
    %v52 = vld [vmem:[#allocation5 + $0x38] sm:$0xff]
    %v53 = vld [vmem:[#allocation5 + $0x40] sm:$0xff]
    %v54 = vld [vmem:[#allocation5 + $0x48] sm:$0xff]
    %v55 = vld [vmem:[#allocation5 + $0x50] sm:$0xff]
    %v56 = vld [vmem:[#allocation5 + $0x58] sm:$0xff]
    %v57 = vld [vmem:[#allocation5 + $0x60] sm:$0xff]
    %v58 = vld [vmem:[#allocation5 + $0x68] sm:$0xff]
    %v59 = vld [vmem:[#allocation5 + $0x70] sm:$0xff]
    %v60 = vld [vmem:[#allocation5 + $0x78] sm:$0xff]
    %61 = vmatprep.subr.mxu0 0.0
    %62 = vmatpush1.msra.mxu0 %v60
    %63 = vmatprep.subr.mxu0 0.0
    %64 = vmatpush1.msra.mxu0 %v59
    %65 = vmatprep.subr.mxu0 0.0
    %66 = vmatpush1.msra.mxu0 %v58
    %67 = vmatprep.subr.mxu0 0.0
    %68 = vmatpush1.msra.mxu0 %v57
    %69 = vmatprep.subr.mxu0 0.0
    %70 = vmatpush1.msra.mxu0 %v56
    %71 = vmatprep.subr.mxu0 0.0
    %72 = vmatpush1.msra.mxu0 %v55
    %73 = vmatprep.subr.mxu0 0.0
    %74 = vmatpush1.msra.mxu0 %v54
    %75 = vmatprep.subr.mxu0 0.0
    %76 = vmatpush1.msra.mxu0 %v53
    %77 = vmatprep.subr.mxu0 0.0
    %78 = vmatpush1.msra.mxu0 %v52
    %79 = vmatprep.subr.mxu0 0.0
    %80 = vmatpush1.msra.mxu0 %v51
    %81 = vmatprep.subr.mxu0 0.0
    %82 = vmatpush1.msra.mxu0 %v50
    %83 = vmatprep.subr.mxu0 0.0
    %84 = vmatpush1.msra.mxu0 %v49
    %85 = vmatprep.subr.mxu0 0.0
    %86 = vmatpush1.msra.mxu0 %v48
    %87 = vmatprep.subr.mxu0 0.0
    %88 = vmatpush1.msra.mxu0 %v47
    %89 = vmatprep.subr.mxu0 0.0
    %90 = vmatpush1.msra.mxu0 %v46
    %91 = vmatprep.subr.mxu0 0.0
    %92 = vmatpush1.msra.mxu0 %v45
    %93 = vmatprep.subr.mxu0 0.0
    %94 = vmatpush2.msra.mxu0 0.0
    %95 = vmatprep.subr.mxu0 0.0
    %96 = vmatpush2.msra.mxu0 0.0
    %97 = vmatprep.subr.mxu0 0.0
    %98 = vmatpush2.msra.mxu0 0.0
    %99 = vmatprep.subr.mxu0 0.0
    %100 = vmatpush2.msra.mxu0 0.0
    %101 = vmatprep.subr.mxu0 0.0
    %102 = vmatpush2.msra.mxu0 0.0
    %103 = vmatprep.subr.mxu0 0.0
    %104 = vmatpush2.msra.mxu0 0.0
    %105 = vmatprep.subr.mxu0 0.0
    %106 = vmatpush2.msra.mxu0 0.0
    %107 = vmatprep.subr.mxu0 0.0
    %108 = vmatpush2.msra.mxu0 0.0
    %109 = vmatprep.subr.mxu0 0.0
    %110 = vmatpush2.msra.mxu0 0.0
    %111 = vmatprep.subr.mxu0 0.0
    %112 = vmatpush2.msra.mxu0 0.0
    %113 = vmatprep.subr.mxu0 0.0
    %114 = vmatpush2.msra.mxu0 0.0
    %115 = vmatprep.subr.mxu0 0.0
    %116 = vmatpush2.msra.mxu0 0.0
    %117 = vmatprep.subr.mxu0 0.0
    %118 = vmatpush2.msra.mxu0 0.0
    %119 = vmatprep.subr.mxu0 0.0
    %120 = vmatpush2.msra.mxu0 0.0
    %121 = vmatprep.subr.mxu0 0.0
    %122 = vmatpush2.msra.mxu0 0.0
    %123 = vmatprep.subr.mxu0 0.0
    %124 = vmatpush2.msra.mxu0 0.0
    %125 = vmatprep.mubr.f32.mxu0 0.0
    %126 = vmatmul.mubr.f32.gmra.mxu0 %v43
    %v127 = vpop.f32.mrf.mxu0
    %v128 = vadd.f32 0.0, %v127
    %v129 = vpop.f32.mrf.mxu0
    %130 = vmatprep.mubr.f32.mxu0 0.0
    %131 = vmatmul.mubr.f32.gmra.mxu0 %v44
    %v132 = vpop.f32.mrf.mxu0
    %v133 = vadd.f32 0.0, %v132
    %v134 = vpop.f32.mrf.mxu0
    %135 = vdwg.mxu0
    %p136 = scmp.eq.s32.totalorder 0, 0
    // Predicated region
    $region22: #{tpu_custom_call.1} parent=1 // pred_check
      %p137 = pneg %p136
    $region23: #{tpu_custom_call.1} parent=1 // pred_check_branch
      %139 = sbr.rel (%p137) target = $region25
    $region24: #{tpu_custom_call.1} parent=1 // pred_region
      %v140 = vld [vmem:[%s2] sm:$0x1]
      %v142 = vlaneseq
      %v143 = vshrl.u32 %v142, 7
      %v144 = vsub.s32 0, %v143
      %v145 = vrot.slane %v140, %v144
      %v147 = vadd.f32 %v145, %v128
      %v148 = vadd.f32 %v145, %v133
      %149 = vst [vmem:[#allocation7] sm:$0xff] %v147
      %150 = vst [vmem:[#allocation7 + $0x8] sm:$0xff] %v148
    $region25: #{tpu_custom_call.1} parent=1 // pred_fallthru
      _
    %p151 = scmp.ne.s32.totalorder 0, 0
    // Predicated region
    $region26: #{tpu_custom_call.1} parent=1 // pred_check
      %p152 = pneg %p151
    $region27: #{tpu_custom_call.1} parent=1 // pred_check_branch
      %154 = sbr.rel (%p152) target = $region29
    $region28: #{tpu_custom_call.1} parent=1 // pred_region
      %v155 = vld [vmem:[#allocation7] sm:$0xff]
      %v156 = vld [vmem:[#allocation7 + $0x8] sm:$0xff]
      %v157 = vadd.f32 %v155, %v128
      %v158 = vadd.f32 %v156, %v133
      %159 = vst [vmem:[#allocation7] sm:$0xff] %v157
      %160 = vst [vmem:[#allocation7 + $0x8] sm:$0xff] %v158
    $region29: #{tpu_custom_call.1} parent=1 // pred_fallthru
      _
    // Predicated region
    $region30: #{tpu_custom_call.1} parent=1 // pred_check
      _
    $region31: #{tpu_custom_call.1} parent=1 // pred_check_branch
      %162 = sbr.rel (0) target = $region33
    $region32: #{tpu_custom_call.1} parent=1 // pred_region
      %s164 = ssub.s32 256, 256
      %165 = vsyncadd [#allocation4], %s164
      %s166 = sshll.u32 [#allocation7], 4
      %s167 = int_to_ptr.vmem [resolvable:$true] %s166
      %172 = dma.vmem_to_hbm [thread:$0]  %s167, 256, %s3, [#allocation4], 128, 128, 8
    $region33: #{tpu_custom_call.1} parent=1 // pred_fallthru
      _
    // Predicated region
    $region34: #{tpu_custom_call.1} parent=1 // pred_check
      _
    $region35: #{tpu_custom_call.1} parent=1 // pred_check_branch
      %174 = sbr.rel (0) target = $region37
    $region36: #{tpu_custom_call.1} parent=1 // pred_region
      %175 = dma.done [#allocation4], 256
    $region37: #{tpu_custom_call.1} parent=1 // pred_fallthru
      _
    %176 = vsyncpa [#allocation3], 1
    %177 = vsyncpa [#allocation6], 1
    %178 = vsyncpa [#allocation4], 1

</llo_original>
